<compile_context>
chip_gen: v7x
topology: tpu7x:2x2x1
jax: 0.10.0
libtpu: 0.0.40
codegen_flags: <defaults>
</compile_context>

<pallas_src>
import functools

import jax
import jax.numpy as jnp
from jax import lax
from jax.experimental import pallas as pl
from jax.experimental.pallas import tpu as pltpu

SMOOTH = 1e-5
_LANES = 128
_SUBLANES = 8


def _chunk_stats(xs, ts):
    """Per-pixel statistics for one chunk.

    xs, ts: lists (length C) of (rows, 128) float32 slabs.
    Returns (inter, zs, ys, ce): per-class element-wise s*t, s*s, t*t and the
    per-pixel soft-target cross entropy, all (rows, 128) float32.
    """
    C = len(xs)

    # Stable log-sum-exp over the class axis (unrolled element-wise VPU work).
    m = xs[0]
    for c in range(1, C):
        m = jnp.maximum(m, xs[c])

    denom = None      # sum_c exp(x_c - m)
    t_sum = None      # sum_c t_c
    t_dot_x = None    # sum_c t_c * (x_c - m)
    inter, zs, ys = [], [], []
    for c in range(C):
        xm = xs[c] - m
        e = jnp.exp(xm)
        denom = e if denom is None else denom + e
        t_sum = ts[c] if t_sum is None else t_sum + ts[c]
        tx = ts[c] * xm
        t_dot_x = tx if t_dot_x is None else t_dot_x + tx
        # Robust, EUP-cheap sigmoid; exactly 0.5 at x == 0 (padding correction).
        s = 0.5 * jnp.tanh(0.5 * xs[c]) + 0.5
        inter.append(s * ts[c])
        zs.append(s * s)
        ys.append(ts[c] * ts[c])

    # CE with probability targets: -sum_c t_c * ((x_c - m) - log(denom)).
    ce = t_sum * jnp.log(denom) - t_dot_x
    return inter, zs, ys, ce


def _dice_bce_kernel(x_ref, t_ref, out_ref,
                     inter_acc, z_acc, y_acc, ce_acc,
                     *, n_classes, chunk, n_chunks):
    C = n_classes
    i = pl.program_id(1)  # pixel-tile (reduction) axis, innermost

    @pl.when(i == 0)
    def _init():
        inter_acc[...] = jnp.zeros_like(inter_acc)
        z_acc[...] = jnp.zeros_like(z_acc)
        y_acc[...] = jnp.zeros_like(y_acc)
        ce_acc[...] = jnp.zeros_like(ce_acc)

    if n_chunks == 1:
        # Whole block is a single native chunk.
        xs = [x_ref[0, c].astype(jnp.float32) for c in range(C)]
        ts = [t_ref[0, c].astype(jnp.float32) for c in range(C)]
        inter, zs, ys, ce = _chunk_stats(xs, ts)
    else:
        # Walk the (C, R, 128) slab in vreg-sized chunks, carrying the partial
        # sums as values (vreg-resident) so the hot loop has no VMEM
        # accumulator read-modify-write traffic.
        def body(j, carry):
            inter, zs, ys, ce = carry
            base = pl.multiple_of(j * chunk, chunk)
            xs = [x_ref[0, c, pl.ds(base, chunk), :].astype(jnp.float32)
                  for c in range(C)]
            ts = [t_ref[0, c, pl.ds(base, chunk), :].astype(jnp.float32)
                  for c in range(C)]
            d_inter, d_z, d_y, d_ce = _chunk_stats(xs, ts)
            inter = tuple(inter[c] + d_inter[c] for c in range(C))
            zs = tuple(zs[c] + d_z[c] for c in range(C))
            ys = tuple(ys[c] + d_y[c] for c in range(C))
            return inter, zs, ys, ce + d_ce

        zero = jnp.zeros((chunk, _LANES), jnp.float32)
        init = (tuple(zero for _ in range(C)),
                tuple(zero for _ in range(C)),
                tuple(zero for _ in range(C)),
                zero)
        inter, zs, ys, ce = lax.fori_loop(0, n_chunks, body, init)

    # One small (3C+1, chunk, 128) accumulator update per grid step.
    for c in range(C):
        inter_acc[c] += inter[c]
        z_acc[c] += zs[c]
        y_acc[c] += ys[c]
    ce_acc[...] += ce

    @pl.when(i == pl.num_programs(1) - 1)
    def _finalize():
        # One sublane reduction per image; lane reduction and the loss combine
        # happen on a tiny array in plain JAX.
        out_ref[0, 0:C, :] = jnp.sum(inter_acc[...], axis=1)
        out_ref[0, C:2 * C, :] = jnp.sum(z_acc[...], axis=1)
        out_ref[0, 2 * C:3 * C, :] = jnp.sum(y_acc[...], axis=1)
        out_ref[0, 3 * C:3 * C + 1, :] = jnp.sum(ce_acc[...], axis=0,
                                                 keepdims=True)


def dice_bce_loss(inputs_nchw, targets_nchw, *, tile_p=131072):
    """inputs/targets: (N, C, H, W). Returns scalar float32 loss."""
    N, C, H, W = inputs_nchw.shape
    assert targets_nchw.shape == (N, C, H, W)
    HW = H * W

    # Chunk = one native vreg tile (sublane count) for the narrower dtype.
    min_itemsize = min(inputs_nchw.dtype.itemsize, targets_nchw.dtype.itemsize)
    chunk = _SUBLANES * max(1, 4 // max(1, min_itemsize))

    total_rows = -(-HW // _LANES)            # rows of 128 pixel lanes
    rows_req = max(1, tile_p // _LANES)

    if total_rows <= chunk:
        # Tiny input: one tile covering everything (full-extent block is legal
        # even when the sublane count is not a multiple of 8).
        rows_per_tile = total_rows
        chunk = total_rows
    else:
        rows_cap = -(-total_rows // chunk) * chunk
        rows_per_tile = max(chunk, min((rows_req // chunk) * chunk, rows_cap))

        # Keep (2 operands x 2 pipeline buffers + accumulators) under ~24 MiB
        # so the same tiling is safe on v7x (64 MiB physical VMEM per core).
        in_bytes = inputs_nchw.dtype.itemsize + targets_nchw.dtype.itemsize

        def _vmem_est(rows):
            return (2 * C * rows * _LANES * in_bytes
                    + (3 * C + 1) * chunk * _LANES * 4)

        budget = 24 * 1024 * 1024
        while rows_per_tile > chunk and _vmem_est(rows_per_tile) > budget:
            rows_per_tile = max(chunk, (rows_per_tile // 2 // chunk) * chunk)

    n_tiles = -(-total_rows // rows_per_tile)
    n_chunks = rows_per_tile // chunk
    rows_padded = n_tiles * rows_per_tile
    HW_pad = rows_padded * _LANES
    num_pad = HW_pad - HW

    # Layout: NCHW -> (N, C, rows, 128). Contiguous reshapes only (no transpose,
    # no dtype cast); zero-pad pixels only when HW is unaligned.
    x = inputs_nchw.reshape(N, C, HW)
    t = targets_nchw.reshape(N, C, HW)
    if num_pad:
        x = jnp.pad(x, ((0, 0), (0, 0), (0, num_pad)))
        t = jnp.pad(t, ((0, 0), (0, 0), (0, num_pad)))
    x = x.reshape(N, C, rows_padded, _LANES)
    t = t.reshape(N, C, rows_padded, _LANES)

    kernel = functools.partial(_dice_bce_kernel, n_classes=C, chunk=chunk,
                               n_chunks=n_chunks)
    out_rows = 3 * C + 1

    parts = pl.pallas_call(
        kernel,
        out_shape=jax.ShapeDtypeStruct((N, out_rows, _LANES), jnp.float32),
        grid_spec=pltpu.PrefetchScalarGridSpec(
            num_scalar_prefetch=0,
            grid=(N, n_tiles),
            in_specs=[
                pl.BlockSpec((1, C, rows_per_tile, _LANES),
                             lambda n, i: (n, 0, i, 0)),
                pl.BlockSpec((1, C, rows_per_tile, _LANES),
                             lambda n, i: (n, 0, i, 0)),
            ],
            out_specs=pl.BlockSpec((1, out_rows, _LANES),
                                   lambda n, i: (n, 0, 0)),
            scratch_shapes=[
                pltpu.VMEM((C, chunk, _LANES), jnp.float32),  # sum(s*t)
                pltpu.VMEM((C, chunk, _LANES), jnp.float32),  # sum(s^2)
                pltpu.VMEM((C, chunk, _LANES), jnp.float32),  # sum(t^2)
                pltpu.VMEM((chunk, _LANES), jnp.float32),     # CE sum
            ],
        ),
        compiler_params=pltpu.CompilerParams(
            dimension_semantics=("parallel", "arbitrary"),
            vmem_limit_bytes=40 * 1024 * 1024,
        ),
    )(x, t)

    # Combine the tiny per-image, per-lane partials in plain JAX.
    sums = jnp.sum(parts, axis=(0, 2))        # (3C+1,)
    inter = sums[0:C]
    z = sums[C:2 * C]
    y = sums[2 * C:3 * C]
    ce_sum = sums[3 * C]

    # Padded pixels (zero logits, zero targets) only pollute sum(s^2):
    # each contributes exactly sigmoid(0)^2 = 0.25 per class.
    if num_pad:
        z = z - 0.25 * float(num_pad * N)

    dice_per_class = 1.0 - (2.0 * inter + SMOOTH) / (z + y + SMOOTH)
    dice = jnp.sum(dice_per_class) / float(C)
    ce = ce_sum / float(N * HW)
    return 0.5 * ce + 0.5 * dice


def _reference(inputs_nchw, targets_nchw):
    """Pure-JAX reference mirroring the PyTorch module."""
    x = inputs_nchw.astype(jnp.float32)
    t = targets_nchw.astype(jnp.float32)
    log_sm = jax.nn.log_softmax(x, axis=1)
    ce = jnp.mean(jnp.sum(-t * log_sm, axis=1))
    s = jax.nn.sigmoid(x)
    C = x.shape[1]
    loss = 0.0
    for c in range(C):
        inter = jnp.sum(s[:, c] * t[:, c])
        z = jnp.sum(s[:, c] * s[:, c])
        y = jnp.sum(t[:, c] * t[:, c])
        loss += 1.0 - (2.0 * inter + SMOOTH) / (z + y + SMOOTH)
    dice = loss / C
    return 0.5 * ce + 0.5 * dice


if __name__ == "__main__":
    key = jax.random.PRNGKey(0)
    k1, k2, k3, k4 = jax.random.split(key, 4)

    # Small shape consistent with the module (N, C, H, W).
    N, C, H, W = 2, 4, 16, 16
    inputs = jax.random.normal(k1, (N, C, H, W), dtype=jnp.float32)
    # Soft (probability) targets with the same shape as inputs.
    targets = jax.nn.softmax(
        jax.random.normal(k2, (N, C, H, W), dtype=jnp.float32), axis=1)

    loss = jax.block_until_ready(dice_bce_loss(inputs, targets))
    ref = jax.block_until_ready(_reference(inputs, targets))
    assert jnp.isfinite(loss), "kernel produced non-finite loss"
    assert jnp.allclose(loss, ref, rtol=1e-4, atol=1e-4), (loss, ref)

    # Larger spatial size: exercises the in-kernel chunk loop (n_chunks > 1)
    # and, with a small tile_p, the multi-pixel-tile accumulation path.
    x2 = jax.random.normal(k3, (N, C, 64, 64), dtype=jnp.float32)
    t2 = jax.nn.softmax(
        jax.random.normal(k4, (N, C, 64, 64), dtype=jnp.float32), axis=1)
    ref2 = jax.block_until_ready(_reference(x2, t2))
    l2a = jax.block_until_ready(dice_bce_loss(x2, t2))                # chunked
    l2b = jax.block_until_ready(dice_bce_loss(x2, t2, tile_p=1024))   # multi-tile
    assert jnp.allclose(l2a, ref2, rtol=1e-4, atol=1e-4), (l2a, ref2)
    assert jnp.allclose(l2b, ref2, rtol=1e-4, atol=1e-4), (l2b, ref2)

    # Ragged spatial size: exercises pixel zero-padding + exact sum(s^2) fix.
    x3 = jax.random.normal(k3, (N, C, 10, 10), dtype=jnp.float32)
    t3 = jax.nn.softmax(
        jax.random.normal(k4, (N, C, 10, 10), dtype=jnp.float32), axis=1)
    l3 = jax.block_until_ready(dice_bce_loss(x3, t3))
    ref3 = jax.block_until_ready(_reference(x3, t3))
    assert jnp.allclose(l3, ref3, rtol=1e-4, atol=1e-4), (l3, ref3)

    print("KERNEL_OK")
</pallas_src>

<mosaic_0001>
module attributes {stable_mosaic.version = 11 : i64} {
  func.func @_dice_bce_kernel(%arg0: i32, %arg1: i32, %arg2: memref<1x4x2x128xf32, #tpu.memory_space<vmem>>, %arg3: memref<1x4x2x128xf32, #tpu.memory_space<vmem>>, %arg4: memref<1x13x128xf32, #tpu.memory_space<vmem>>, %arg5: memref<4x2x128xf32, #tpu.memory_space<vmem>>, %arg6: memref<4x2x128xf32, #tpu.memory_space<vmem>>, %arg7: memref<4x2x128xf32, #tpu.memory_space<vmem>>, %arg8: memref<2x128xf32, #tpu.memory_space<vmem>>) attributes {dimension_semantics = [#tpu.dimension_semantics<parallel>, #tpu.dimension_semantics<arbitrary>], iteration_bounds = array<i64: 2, 1>, scalar_prefetch = 0 : i64, scratch_operands = 4 : i64, tpu.core_type = #tpu.core_type<tc>, window_params = [{transform_indices = @transform_0, window_bounds = array<i64: 1, 4, 2, 128>}, {transform_indices = @transform_1, window_bounds = array<i64: 1, 4, 2, 128>}, {transform_indices = @transform_2, window_bounds = array<i64: 1, 13, 128>}]} {
    %c0_i32 = arith.constant 0 : i32
    %0 = arith.cmpi eq, %arg1, %c0_i32 : i32
    %1 = arith.extui %0 : i1 to i32
    %c0_i32_0 = arith.constant 0 : i32
    %2 = arith.cmpi ne, %1, %c0_i32_0 : i32
    scf.if %2 {
      %cst_118 = arith.constant 0.000000e+00 : f32
      %164 = vector.broadcast %cst_118 : f32 to vector<4x2x128xf32>
      %c0_119 = arith.constant 0 : index
      %c0_120 = arith.constant 0 : index
      %c0_121 = arith.constant 0 : index
      %165 = vector.load %arg5[%c0_119, %c0_120, %c0_121] : memref<4x2x128xf32, #tpu.memory_space<vmem>>, vector<4x2x128xf32>
      tpu.vector_store %arg5[%c0_119, %c0_120, %c0_121], %164 {strides = array<i32>} : memref<4x2x128xf32, #tpu.memory_space<vmem>>, vector<4x2x128xf32>,
      %cst_122 = arith.constant 0.000000e+00 : f32
      %166 = vector.broadcast %cst_122 : f32 to vector<4x2x128xf32>
      %c0_123 = arith.constant 0 : index
      %c0_124 = arith.constant 0 : index
      %c0_125 = arith.constant 0 : index
      %167 = vector.load %arg6[%c0_123, %c0_124, %c0_125] : memref<4x2x128xf32, #tpu.memory_space<vmem>>, vector<4x2x128xf32>
      tpu.vector_store %arg6[%c0_123, %c0_124, %c0_125], %166 {strides = array<i32>} : memref<4x2x128xf32, #tpu.memory_space<vmem>>, vector<4x2x128xf32>,
      %cst_126 = arith.constant 0.000000e+00 : f32
      %168 = vector.broadcast %cst_126 : f32 to vector<4x2x128xf32>
      %c0_127 = arith.constant 0 : index
      %c0_128 = arith.constant 0 : index
      %c0_129 = arith.constant 0 : index
      %169 = vector.load %arg7[%c0_127, %c0_128, %c0_129] : memref<4x2x128xf32, #tpu.memory_space<vmem>>, vector<4x2x128xf32>
      tpu.vector_store %arg7[%c0_127, %c0_128, %c0_129], %168 {strides = array<i32>} : memref<4x2x128xf32, #tpu.memory_space<vmem>>, vector<4x2x128xf32>,
      %cst_130 = arith.constant 0.000000e+00 : f32
      %170 = vector.broadcast %cst_130 : f32 to vector<2x128xf32>
      %c0_131 = arith.constant 0 : index
      %c0_132 = arith.constant 0 : index
      %171 = vector.load %arg8[%c0_131, %c0_132] : memref<2x128xf32, #tpu.memory_space<vmem>>, vector<2x128xf32>
      tpu.vector_store %arg8[%c0_131, %c0_132], %170 {strides = array<i32>} : memref<2x128xf32, #tpu.memory_space<vmem>>, vector<2x128xf32>,
    } else {
    }
    %c0 = arith.constant 0 : index
    %c0_1 = arith.constant 0 : index
    %c0_2 = arith.constant 0 : index
    %c0_3 = arith.constant 0 : index
    %3 = vector.load %arg2[%c0, %c0_1, %c0_2, %c0_3] : memref<1x4x2x128xf32, #tpu.memory_space<vmem>>, vector<1x1x2x128xf32>
    %4 = vector.shape_cast %3 : vector<1x1x2x128xf32> to vector<2x128xf32>
    %c0_4 = arith.constant 0 : index
    %c1 = arith.constant 1 : index
    %c0_5 = arith.constant 0 : index
    %c0_6 = arith.constant 0 : index
    %5 = vector.load %arg2[%c0_4, %c1, %c0_5, %c0_6] : memref<1x4x2x128xf32, #tpu.memory_space<vmem>>, vector<1x1x2x128xf32>
    %6 = vector.shape_cast %5 : vector<1x1x2x128xf32> to vector<2x128xf32>
    %c0_7 = arith.constant 0 : index
    %c2 = arith.constant 2 : index
    %c0_8 = arith.constant 0 : index
    %c0_9 = arith.constant 0 : index
    %7 = vector.load %arg2[%c0_7, %c2, %c0_8, %c0_9] : memref<1x4x2x128xf32, #tpu.memory_space<vmem>>, vector<1x1x2x128xf32>
    %8 = vector.shape_cast %7 : vector<1x1x2x128xf32> to vector<2x128xf32>
    %c0_10 = arith.constant 0 : index
    %c3 = arith.constant 3 : index
    %c0_11 = arith.constant 0 : index
    %c0_12 = arith.constant 0 : index
    %9 = vector.load %arg2[%c0_10, %c3, %c0_11, %c0_12] : memref<1x4x2x128xf32, #tpu.memory_space<vmem>>, vector<1x1x2x128xf32>
    %10 = vector.shape_cast %9 : vector<1x1x2x128xf32> to vector<2x128xf32>
    %c0_13 = arith.constant 0 : index
    %c0_14 = arith.constant 0 : index
    %c0_15 = arith.constant 0 : index
    %c0_16 = arith.constant 0 : index
    %11 = vector.load %arg3[%c0_13, %c0_14, %c0_15, %c0_16] : memref<1x4x2x128xf32, #tpu.memory_space<vmem>>, vector<1x1x2x128xf32>
    %12 = vector.shape_cast %11 : vector<1x1x2x128xf32> to vector<2x128xf32>
    %c0_17 = arith.constant 0 : index
    %c1_18 = arith.constant 1 : index
    %c0_19 = arith.constant 0 : index
    %c0_20 = arith.constant 0 : index
    %13 = vector.load %arg3[%c0_17, %c1_18, %c0_19, %c0_20] : memref<1x4x2x128xf32, #tpu.memory_space<vmem>>, vector<1x1x2x128xf32>
    %14 = vector.shape_cast %13 : vector<1x1x2x128xf32> to vector<2x128xf32>
    %c0_21 = arith.constant 0 : index
    %c2_22 = arith.constant 2 : index
    %c0_23 = arith.constant 0 : index
    %c0_24 = arith.constant 0 : index
    %15 = vector.load %arg3[%c0_21, %c2_22, %c0_23, %c0_24] : memref<1x4x2x128xf32, #tpu.memory_space<vmem>>, vector<1x1x2x128xf32>
    %16 = vector.shape_cast %15 : vector<1x1x2x128xf32> to vector<2x128xf32>
    %c0_25 = arith.constant 0 : index
    %c3_26 = arith.constant 3 : index
    %c0_27 = arith.constant 0 : index
    %c0_28 = arith.constant 0 : index
    %17 = vector.load %arg3[%c0_25, %c3_26, %c0_27, %c0_28] : memref<1x4x2x128xf32, #tpu.memory_space<vmem>>, vector<1x1x2x128xf32>
    %18 = vector.shape_cast %17 : vector<1x1x2x128xf32> to vector<2x128xf32>
    %19 = arith.maximumf %4, %6 : vector<2x128xf32>
    %20 = arith.maximumf %19, %8 : vector<2x128xf32>
    %21 = arith.maximumf %20, %10 : vector<2x128xf32>
    %22 = arith.subf %4, %21 : vector<2x128xf32>
    %23 = math.exp %22 : vector<2x128xf32>
    %24 = arith.mulf %12, %22 : vector<2x128xf32>
    %cst = arith.constant 5.000000e-01 : f32
    %25 = vector.broadcast %cst : f32 to vector<2x128xf32>
    %26 = arith.mulf %25, %4 : vector<2x128xf32>
    %27 = math.tanh %26 : vector<2x128xf32>
    %cst_29 = arith.constant 5.000000e-01 : f32
    %28 = vector.broadcast %cst_29 : f32 to vector<2x128xf32>
    %29 = arith.mulf %28, %27 : vector<2x128xf32>
    %cst_30 = arith.constant 5.000000e-01 : f32
    %30 = vector.broadcast %cst_30 : f32 to vector<2x128xf32>
    %31 = arith.addf %29, %30 : vector<2x128xf32>
    %32 = arith.mulf %31, %12 : vector<2x128xf32>
    %33 = arith.mulf %31, %31 : vector<2x128xf32>
    %34 = arith.mulf %12, %12 : vector<2x128xf32>
    %35 = arith.subf %6, %21 : vector<2x128xf32>
    %36 = math.exp %35 : vector<2x128xf32>
    %37 = arith.addf %23, %36 : vector<2x128xf32>
    %38 = arith.addf %12, %14 : vector<2x128xf32>
    %39 = arith.mulf %14, %35 : vector<2x128xf32>
    %40 = arith.addf %24, %39 : vector<2x128xf32>
    %cst_31 = arith.constant 5.000000e-01 : f32
    %41 = vector.broadcast %cst_31 : f32 to vector<2x128xf32>
    %42 = arith.mulf %41, %6 : vector<2x128xf32>
    %43 = math.tanh %42 : vector<2x128xf32>
    %cst_32 = arith.constant 5.000000e-01 : f32
    %44 = vector.broadcast %cst_32 : f32 to vector<2x128xf32>
    %45 = arith.mulf %44, %43 : vector<2x128xf32>
    %cst_33 = arith.constant 5.000000e-01 : f32
    %46 = vector.broadcast %cst_33 : f32 to vector<2x128xf32>
    %47 = arith.addf %45, %46 : vector<2x128xf32>
    %48 = arith.mulf %47, %14 : vector<2x128xf32>
    %49 = arith.mulf %47, %47 : vector<2x128xf32>
    %50 = arith.mulf %14, %14 : vector<2x128xf32>
    %51 = arith.subf %8, %21 : vector<2x128xf32>
    %52 = math.exp %51 : vector<2x128xf32>
    %53 = arith.addf %37, %52 : vector<2x128xf32>
    %54 = arith.addf %38, %16 : vector<2x128xf32>
    %55 = arith.mulf %16, %51 : vector<2x128xf32>
    %56 = arith.addf %40, %55 : vector<2x128xf32>
    %cst_34 = arith.constant 5.000000e-01 : f32
    %57 = vector.broadcast %cst_34 : f32 to vector<2x128xf32>
    %58 = arith.mulf %57, %8 : vector<2x128xf32>
    %59 = math.tanh %58 : vector<2x128xf32>
    %cst_35 = arith.constant 5.000000e-01 : f32
    %60 = vector.broadcast %cst_35 : f32 to vector<2x128xf32>
    %61 = arith.mulf %60, %59 : vector<2x128xf32>
    %cst_36 = arith.constant 5.000000e-01 : f32
    %62 = vector.broadcast %cst_36 : f32 to vector<2x128xf32>
    %63 = arith.addf %61, %62 : vector<2x128xf32>
    %64 = arith.mulf %63, %16 : vector<2x128xf32>
    %65 = arith.mulf %63, %63 : vector<2x128xf32>
    %66 = arith.mulf %16, %16 : vector<2x128xf32>
    %67 = arith.subf %10, %21 : vector<2x128xf32>
    %68 = math.exp %67 : vector<2x128xf32>
    %69 = arith.addf %53, %68 : vector<2x128xf32>
    %70 = arith.addf %54, %18 : vector<2x128xf32>
    %71 = arith.mulf %18, %67 : vector<2x128xf32>
    %72 = arith.addf %56, %71 : vector<2x128xf32>
    %cst_37 = arith.constant 5.000000e-01 : f32
    %73 = vector.broadcast %cst_37 : f32 to vector<2x128xf32>
    %74 = arith.mulf %73, %10 : vector<2x128xf32>
    %75 = math.tanh %74 : vector<2x128xf32>
    %cst_38 = arith.constant 5.000000e-01 : f32
    %76 = vector.broadcast %cst_38 : f32 to vector<2x128xf32>
    %77 = arith.mulf %76, %75 : vector<2x128xf32>
    %cst_39 = arith.constant 5.000000e-01 : f32
    %78 = vector.broadcast %cst_39 : f32 to vector<2x128xf32>
    %79 = arith.addf %77, %78 : vector<2x128xf32>
    %80 = arith.mulf %79, %18 : vector<2x128xf32>
    %81 = arith.mulf %79, %79 : vector<2x128xf32>
    %82 = arith.mulf %18, %18 : vector<2x128xf32>
    %83 = math.log %69 : vector<2x128xf32>
    %84 = arith.mulf %70, %83 : vector<2x128xf32>
    %85 = arith.subf %84, %72 : vector<2x128xf32>
    %c0_40 = arith.constant 0 : index
    %c0_41 = arith.constant 0 : index
    %c0_42 = arith.constant 0 : index
    %86 = vector.load %arg5[%c0_40, %c0_41, %c0_42] : memref<4x2x128xf32, #tpu.memory_space<vmem>>, vector<1x2x128xf32>
    %87 = vector.shape_cast %86 : vector<1x2x128xf32> to vector<2x128xf32>
    %88 = arith.addf %87, %32 : vector<2x128xf32>
    %c0_43 = arith.constant 0 : index
    %c0_44 = arith.constant 0 : index
    %c0_45 = arith.constant 0 : index
    %89 = vector.load %arg5[%c0_43, %c0_44, %c0_45] : memref<4x2x128xf32, #tpu.memory_space<vmem>>, vector<1x2x128xf32>
    %90 = vector.shape_cast %89 : vector<1x2x128xf32> to vector<2x128xf32>
    %91 = vector.shape_cast %88 : vector<2x128xf32> to vector<1x2x128xf32>
    tpu.vector_store %arg5[%c0_43, %c0_44, %c0_45], %91 {strides = array<i32>} : memref<4x2x128xf32, #tpu.memory_space<vmem>>, vector<1x2x128xf32>,
    %c0_46 = arith.constant 0 : index
    %c0_47 = arith.constant 0 : index
    %c0_48 = arith.constant 0 : index
    %92 = vector.load %arg6[%c0_46, %c0_47, %c0_48] : memref<4x2x128xf32, #tpu.memory_space<vmem>>, vector<1x2x128xf32>
    %93 = vector.shape_cast %92 : vector<1x2x128xf32> to vector<2x128xf32>
    %94 = arith.addf %93, %33 : vector<2x128xf32>
    %c0_49 = arith.constant 0 : index
    %c0_50 = arith.constant 0 : index
    %c0_51 = arith.constant 0 : index
    %95 = vector.load %arg6[%c0_49, %c0_50, %c0_51] : memref<4x2x128xf32, #tpu.memory_space<vmem>>, vector<1x2x128xf32>
    %96 = vector.shape_cast %95 : vector<1x2x128xf32> to vector<2x128xf32>
    %97 = vector.shape_cast %94 : vector<2x128xf32> to vector<1x2x128xf32>
    tpu.vector_store %arg6[%c0_49, %c0_50, %c0_51], %97 {strides = array<i32>} : memref<4x2x128xf32, #tpu.memory_space<vmem>>, vector<1x2x128xf32>,
    %c0_52 = arith.constant 0 : index
    %c0_53 = arith.constant 0 : index
    %c0_54 = arith.constant 0 : index
    %98 = vector.load %arg7[%c0_52, %c0_53, %c0_54] : memref<4x2x128xf32, #tpu.memory_space<vmem>>, vector<1x2x128xf32>
    %99 = vector.shape_cast %98 : vector<1x2x128xf32> to vector<2x128xf32>
    %100 = arith.addf %99, %34 : vector<2x128xf32>
    %c0_55 = arith.constant 0 : index
    %c0_56 = arith.constant 0 : index
    %c0_57 = arith.constant 0 : index
    %101 = vector.load %arg7[%c0_55, %c0_56, %c0_57] : memref<4x2x128xf32, #tpu.memory_space<vmem>>, vector<1x2x128xf32>
    %102 = vector.shape_cast %101 : vector<1x2x128xf32> to vector<2x128xf32>
    %103 = vector.shape_cast %100 : vector<2x128xf32> to vector<1x2x128xf32>
    tpu.vector_store %arg7[%c0_55, %c0_56, %c0_57], %103 {strides = array<i32>} : memref<4x2x128xf32, #tpu.memory_space<vmem>>, vector<1x2x128xf32>,
    %c1_58 = arith.constant 1 : index
    %c0_59 = arith.constant 0 : index
    %c0_60 = arith.constant 0 : index
    %104 = vector.load %arg5[%c1_58, %c0_59, %c0_60] : memref<4x2x128xf32, #tpu.memory_space<vmem>>, vector<1x2x128xf32>
    %105 = vector.shape_cast %104 : vector<1x2x128xf32> to vector<2x128xf32>
    %106 = arith.addf %105, %48 : vector<2x128xf32>
    %c1_61 = arith.constant 1 : index
    %c0_62 = arith.constant 0 : index
    %c0_63 = arith.constant 0 : index
    %107 = vector.load %arg5[%c1_61, %c0_62, %c0_63] : memref<4x2x128xf32, #tpu.memory_space<vmem>>, vector<1x2x128xf32>
    %108 = vector.shape_cast %107 : vector<1x2x128xf32> to vector<2x128xf32>
    %109 = vector.shape_cast %106 : vector<2x128xf32> to vector<1x2x128xf32>
    tpu.vector_store %arg5[%c1_61, %c0_62, %c0_63], %109 {strides = array<i32>} : memref<4x2x128xf32, #tpu.memory_space<vmem>>, vector<1x2x128xf32>,
    %c1_64 = arith.constant 1 : index
    %c0_65 = arith.constant 0 : index
    %c0_66 = arith.constant 0 : index
    %110 = vector.load %arg6[%c1_64, %c0_65, %c0_66] : memref<4x2x128xf32, #tpu.memory_space<vmem>>, vector<1x2x128xf32>
    %111 = vector.shape_cast %110 : vector<1x2x128xf32> to vector<2x128xf32>
    %112 = arith.addf %111, %49 : vector<2x128xf32>
    %c1_67 = arith.constant 1 : index
    %c0_68 = arith.constant 0 : index
    %c0_69 = arith.constant 0 : index
    %113 = vector.load %arg6[%c1_67, %c0_68, %c0_69] : memref<4x2x128xf32, #tpu.memory_space<vmem>>, vector<1x2x128xf32>
    %114 = vector.shape_cast %113 : vector<1x2x128xf32> to vector<2x128xf32>
    %115 = vector.shape_cast %112 : vector<2x128xf32> to vector<1x2x128xf32>
    tpu.vector_store %arg6[%c1_67, %c0_68, %c0_69], %115 {strides = array<i32>} : memref<4x2x128xf32, #tpu.memory_space<vmem>>, vector<1x2x128xf32>,
    %c1_70 = arith.constant 1 : index
    %c0_71 = arith.constant 0 : index
    %c0_72 = arith.constant 0 : index
    %116 = vector.load %arg7[%c1_70, %c0_71, %c0_72] : memref<4x2x128xf32, #tpu.memory_space<vmem>>, vector<1x2x128xf32>
    %117 = vector.shape_cast %116 : vector<1x2x128xf32> to vector<2x128xf32>
    %118 = arith.addf %117, %50 : vector<2x128xf32>
    %c1_73 = arith.constant 1 : index
    %c0_74 = arith.constant 0 : index
    %c0_75 = arith.constant 0 : index
    %119 = vector.load %arg7[%c1_73, %c0_74, %c0_75] : memref<4x2x128xf32, #tpu.memory_space<vmem>>, vector<1x2x128xf32>
    %120 = vector.shape_cast %119 : vector<1x2x128xf32> to vector<2x128xf32>
    %121 = vector.shape_cast %118 : vector<2x128xf32> to vector<1x2x128xf32>
    tpu.vector_store %arg7[%c1_73, %c0_74, %c0_75], %121 {strides = array<i32>} : memref<4x2x128xf32, #tpu.memory_space<vmem>>, vector<1x2x128xf32>,
    %c2_76 = arith.constant 2 : index
    %c0_77 = arith.constant 0 : index
    %c0_78 = arith.constant 0 : index
    %122 = vector.load %arg5[%c2_76, %c0_77, %c0_78] : memref<4x2x128xf32, #tpu.memory_space<vmem>>, vector<1x2x128xf32>
    %123 = vector.shape_cast %122 : vector<1x2x128xf32> to vector<2x128xf32>
    %124 = arith.addf %123, %64 : vector<2x128xf32>
    %c2_79 = arith.constant 2 : index
    %c0_80 = arith.constant 0 : index
    %c0_81 = arith.constant 0 : index
    %125 = vector.load %arg5[%c2_79, %c0_80, %c0_81] : memref<4x2x128xf32, #tpu.memory_space<vmem>>, vector<1x2x128xf32>
    %126 = vector.shape_cast %125 : vector<1x2x128xf32> to vector<2x128xf32>
    %127 = vector.shape_cast %124 : vector<2x128xf32> to vector<1x2x128xf32>
    tpu.vector_store %arg5[%c2_79, %c0_80, %c0_81], %127 {strides = array<i32>} : memref<4x2x128xf32, #tpu.memory_space<vmem>>, vector<1x2x128xf32>,
    %c2_82 = arith.constant 2 : index
    %c0_83 = arith.constant 0 : index
    %c0_84 = arith.constant 0 : index
    %128 = vector.load %arg6[%c2_82, %c0_83, %c0_84] : memref<4x2x128xf32, #tpu.memory_space<vmem>>, vector<1x2x128xf32>
    %129 = vector.shape_cast %128 : vector<1x2x128xf32> to vector<2x128xf32>
    %130 = arith.addf %129, %65 : vector<2x128xf32>
    %c2_85 = arith.constant 2 : index
    %c0_86 = arith.constant 0 : index
    %c0_87 = arith.constant 0 : index
    %131 = vector.load %arg6[%c2_85, %c0_86, %c0_87] : memref<4x2x128xf32, #tpu.memory_space<vmem>>, vector<1x2x128xf32>
    %132 = vector.shape_cast %131 : vector<1x2x128xf32> to vector<2x128xf32>
    %133 = vector.shape_cast %130 : vector<2x128xf32> to vector<1x2x128xf32>
    tpu.vector_store %arg6[%c2_85, %c0_86, %c0_87], %133 {strides = array<i32>} : memref<4x2x128xf32, #tpu.memory_space<vmem>>, vector<1x2x128xf32>,
    %c2_88 = arith.constant 2 : index
    %c0_89 = arith.constant 0 : index
    %c0_90 = arith.constant 0 : index
    %134 = vector.load %arg7[%c2_88, %c0_89, %c0_90] : memref<4x2x128xf32, #tpu.memory_space<vmem>>, vector<1x2x128xf32>
    %135 = vector.shape_cast %134 : vector<1x2x128xf32> to vector<2x128xf32>
    %136 = arith.addf %135, %66 : vector<2x128xf32>
    %c2_91 = arith.constant 2 : index
    %c0_92 = arith.constant 0 : index
    %c0_93 = arith.constant 0 : index
    %137 = vector.load %arg7[%c2_91, %c0_92, %c0_93] : memref<4x2x128xf32, #tpu.memory_space<vmem>>, vector<1x2x128xf32>
    %138 = vector.shape_cast %137 : vector<1x2x128xf32> to vector<2x128xf32>
    %139 = vector.shape_cast %136 : vector<2x128xf32> to vector<1x2x128xf32>
    tpu.vector_store %arg7[%c2_91, %c0_92, %c0_93], %139 {strides = array<i32>} : memref<4x2x128xf32, #tpu.memory_space<vmem>>, vector<1x2x128xf32>,
    %c3_94 = arith.constant 3 : index
    %c0_95 = arith.constant 0 : index
    %c0_96 = arith.constant 0 : index
    %140 = vector.load %arg5[%c3_94, %c0_95, %c0_96] : memref<4x2x128xf32, #tpu.memory_space<vmem>>, vector<1x2x128xf32>
    %141 = vector.shape_cast %140 : vector<1x2x128xf32> to vector<2x128xf32>
    %142 = arith.addf %141, %80 : vector<2x128xf32>
    %c3_97 = arith.constant 3 : index
    %c0_98 = arith.constant 0 : index
    %c0_99 = arith.constant 0 : index
    %143 = vector.load %arg5[%c3_97, %c0_98, %c0_99] : memref<4x2x128xf32, #tpu.memory_space<vmem>>, vector<1x2x128xf32>
    %144 = vector.shape_cast %143 : vector<1x2x128xf32> to vector<2x128xf32>
    %145 = vector.shape_cast %142 : vector<2x128xf32> to vector<1x2x128xf32>
    tpu.vector_store %arg5[%c3_97, %c0_98, %c0_99], %145 {strides = array<i32>} : memref<4x2x128xf32, #tpu.memory_space<vmem>>, vector<1x2x128xf32>,
    %c3_100 = arith.constant 3 : index
    %c0_101 = arith.constant 0 : index
    %c0_102 = arith.constant 0 : index
    %146 = vector.load %arg6[%c3_100, %c0_101, %c0_102] : memref<4x2x128xf32, #tpu.memory_space<vmem>>, vector<1x2x128xf32>
    %147 = vector.shape_cast %146 : vector<1x2x128xf32> to vector<2x128xf32>
    %148 = arith.addf %147, %81 : vector<2x128xf32>
    %c3_103 = arith.constant 3 : index
    %c0_104 = arith.constant 0 : index
    %c0_105 = arith.constant 0 : index
    %149 = vector.load %arg6[%c3_103, %c0_104, %c0_105] : memref<4x2x128xf32, #tpu.memory_space<vmem>>, vector<1x2x128xf32>
    %150 = vector.shape_cast %149 : vector<1x2x128xf32> to vector<2x128xf32>
    %151 = vector.shape_cast %148 : vector<2x128xf32> to vector<1x2x128xf32>
    tpu.vector_store %arg6[%c3_103, %c0_104, %c0_105], %151 {strides = array<i32>} : memref<4x2x128xf32, #tpu.memory_space<vmem>>, vector<1x2x128xf32>,
    %c3_106 = arith.constant 3 : index
    %c0_107 = arith.constant 0 : index
    %c0_108 = arith.constant 0 : index
    %152 = vector.load %arg7[%c3_106, %c0_107, %c0_108] : memref<4x2x128xf32, #tpu.memory_space<vmem>>, vector<1x2x128xf32>
    %153 = vector.shape_cast %152 : vector<1x2x128xf32> to vector<2x128xf32>
    %154 = arith.addf %153, %82 : vector<2x128xf32>
    %c3_109 = arith.constant 3 : index
    %c0_110 = arith.constant 0 : index
    %c0_111 = arith.constant 0 : index
    %155 = vector.load %arg7[%c3_109, %c0_110, %c0_111] : memref<4x2x128xf32, #tpu.memory_space<vmem>>, vector<1x2x128xf32>
    %156 = vector.shape_cast %155 : vector<1x2x128xf32> to vector<2x128xf32>
    %157 = vector.shape_cast %154 : vector<2x128xf32> to vector<1x2x128xf32>
    tpu.vector_store %arg7[%c3_109, %c0_110, %c0_111], %157 {strides = array<i32>} : memref<4x2x128xf32, #tpu.memory_space<vmem>>, vector<1x2x128xf32>,
    %c0_112 = arith.constant 0 : index
    %c0_113 = arith.constant 0 : index
    %158 = vector.load %arg8[%c0_112, %c0_113] : memref<2x128xf32, #tpu.memory_space<vmem>>, vector<2x128xf32>
    %159 = arith.addf %158, %85 : vector<2x128xf32>
    %c0_114 = arith.constant 0 : index
    %c0_115 = arith.constant 0 : index
    %160 = vector.load %arg8[%c0_114, %c0_115] : memref<2x128xf32, #tpu.memory_space<vmem>>, vector<2x128xf32>
    tpu.vector_store %arg8[%c0_114, %c0_115], %159 {strides = array<i32>} : memref<2x128xf32, #tpu.memory_space<vmem>>, vector<2x128xf32>,
    %c0_i32_116 = arith.constant 0 : i32
    %161 = arith.cmpi eq, %arg1, %c0_i32_116 : i32
    %162 = arith.extui %161 : i1 to i32
    %c0_i32_117 = arith.constant 0 : i32
    %163 = arith.cmpi ne, %162, %c0_i32_117 : i32
    scf.if %163 {
      %c0_118 = arith.constant 0 : index
      %c0_119 = arith.constant 0 : index
      %c0_120 = arith.constant 0 : index
      %164 = vector.load %arg5[%c0_118, %c0_119, %c0_120] : memref<4x2x128xf32, #tpu.memory_space<vmem>>, vector<4x2x128xf32>
      %cst_121 = arith.constant dense<0.000000e+00> : vector<4x128xf32>
      %165 = vector.multi_reduction <add>, %164, %cst_121 [1] : vector<4x2x128xf32> to vector<4x128xf32>
      %c0_122 = arith.constant 0 : index
      %c0_123 = arith.constant 0 : index
      %c0_124 = arith.constant 0 : index
      %166 = vector.load %arg4[%c0_122, %c0_123, %c0_124] : memref<1x13x128xf32, #tpu.memory_space<vmem>>, vector<1x4x128xf32>
      %167 = vector.shape_cast %166 : vector<1x4x128xf32> to vector<4x128xf32>
      %168 = vector.shape_cast %165 : vector<4x128xf32> to vector<1x4x128xf32>
      tpu.vector_store %arg4[%c0_122, %c0_123, %c0_124], %168 {strides = array<i32>} : memref<1x13x128xf32, #tpu.memory_space<vmem>>, vector<1x4x128xf32>,
      %c0_125 = arith.constant 0 : index
      %c0_126 = arith.constant 0 : index
      %c0_127 = arith.constant 0 : index
      %169 = vector.load %arg6[%c0_125, %c0_126, %c0_127] : memref<4x2x128xf32, #tpu.memory_space<vmem>>, vector<4x2x128xf32>
      %cst_128 = arith.constant dense<0.000000e+00> : vector<4x128xf32>
      %170 = vector.multi_reduction <add>, %169, %cst_128 [1] : vector<4x2x128xf32> to vector<4x128xf32>
      %c0_129 = arith.constant 0 : index
      %c4 = arith.constant 4 : index
      %c0_130 = arith.constant 0 : index
      %171 = vector.load %arg4[%c0_129, %c4, %c0_130] : memref<1x13x128xf32, #tpu.memory_space<vmem>>, vector<1x4x128xf32>
      %172 = vector.shape_cast %171 : vector<1x4x128xf32> to vector<4x128xf32>
      %173 = vector.shape_cast %170 : vector<4x128xf32> to vector<1x4x128xf32>
      tpu.vector_store %arg4[%c0_129, %c4, %c0_130], %173 {strides = array<i32>} : memref<1x13x128xf32, #tpu.memory_space<vmem>>, vector<1x4x128xf32>,
      %c0_131 = arith.constant 0 : index
      %c0_132 = arith.constant 0 : index
      %c0_133 = arith.constant 0 : index
      %174 = vector.load %arg7[%c0_131, %c0_132, %c0_133] : memref<4x2x128xf32, #tpu.memory_space<vmem>>, vector<4x2x128xf32>
      %cst_134 = arith.constant dense<0.000000e+00> : vector<4x128xf32>
      %175 = vector.multi_reduction <add>, %174, %cst_134 [1] : vector<4x2x128xf32> to vector<4x128xf32>
      %c0_135 = arith.constant 0 : index
      %c8 = arith.constant 8 : index
      %c0_136 = arith.constant 0 : index
      %176 = vector.load %arg4[%c0_135, %c8, %c0_136] : memref<1x13x128xf32, #tpu.memory_space<vmem>>, vector<1x4x128xf32>
      %177 = vector.shape_cast %176 : vector<1x4x128xf32> to vector<4x128xf32>
      %178 = vector.shape_cast %175 : vector<4x128xf32> to vector<1x4x128xf32>
      tpu.vector_store %arg4[%c0_135, %c8, %c0_136], %178 {strides = array<i32>} : memref<1x13x128xf32, #tpu.memory_space<vmem>>, vector<1x4x128xf32>,
      %c0_137 = arith.constant 0 : index
      %c0_138 = arith.constant 0 : index
      %179 = vector.load %arg8[%c0_137, %c0_138] : memref<2x128xf32, #tpu.memory_space<vmem>>, vector<2x128xf32>
      %cst_139 = arith.constant dense<0.000000e+00> : vector<128xf32>
      %180 = vector.multi_reduction <add>, %179, %cst_139 [0] : vector<2x128xf32> to vector<128xf32>
      %181 = vector.shape_cast %180 : vector<128xf32> to vector<1x128xf32>
      %c0_140 = arith.constant 0 : index
      %c12 = arith.constant 12 : index
      %c0_141 = arith.constant 0 : index
      %182 = vector.load %arg4[%c0_140, %c12, %c0_141] : memref<1x13x128xf32, #tpu.memory_space<vmem>>, vector<1x1x128xf32>
      %183 = vector.shape_cast %182 : vector<1x1x128xf32> to vector<1x128xf32>
      %184 = vector.shape_cast %181 : vector<1x128xf32> to vector<1x1x128xf32>
      tpu.vector_store %arg4[%c0_140, %c12, %c0_141], %184 {strides = array<i32>} : memref<1x13x128xf32, #tpu.memory_space<vmem>>, vector<1x1x128xf32>,
    } else {
    }
    return
  }
  func.func @transform_0(%arg0: i32, %arg1: i32) -> (i32, i32, i32, i32) {
    %c0_i32 = arith.constant 0 : i32
    %c0_i32_0 = arith.constant 0 : i32
    %c0_i32_1 = arith.constant 0 : i32
    return %arg0, %c0_i32, %arg1, %c0_i32_0 : i32, i32, i32, i32
  }
  func.func @transform_1(%arg0: i32, %arg1: i32) -> (i32, i32, i32, i32) {
    %c0_i32 = arith.constant 0 : i32
    %c0_i32_0 = arith.constant 0 : i32
    %c0_i32_1 = arith.constant 0 : i32
    return %arg0, %c0_i32, %arg1, %c0_i32_0 : i32, i32, i32, i32
  }
  func.func @transform_2(%arg0: i32, %arg1: i32) -> (i32, i32, i32) {
    %c0_i32 = arith.constant 0 : i32
    %c0_i32_0 = arith.constant 0 : i32
    %c0_i32_1 = arith.constant 0 : i32
    return %arg0, %c0_i32, %c0_i32_0 : i32, i32, i32
  }
}

</mosaic_0001>

<llo_original>
// kernel: tpu_custom_call.1
$region0: #{tpu_custom_call.1}
  #allocation0 [shape = 'u32[]', space=smem, size = 0x4, offset = 0x4, fixed_abs, tag = 'smem constant byte address 0x4 - core index']
  #allocation1 [shape = 'u32[144,128]{1,0:T(1,128)}', space=vmem, size = 0x12000, scoped, tag = 'internal scratch']
  #allocation2 [shape = 'f32[4,2,128]{2,1,0:T(2,128)}', space=vmem, size = 0x1000, scoped, tag = 'scratch operand']
  #allocation3 [shape = 'f32[4,2,128]{2,1,0:T(2,128)}', space=vmem, size = 0x1000, scoped, tag = 'scratch operand']
  #allocation4 [shape = 'f32[4,2,128]{2,1,0:T(2,128)}', space=vmem, size = 0x1000, scoped, tag = 'scratch operand']
  #allocation5 [shape = 'f32[2,128]{1,0:T(2,128)}', space=vmem, size = 0x400, scoped, tag = 'scratch operand']
  %s0 = inlined_call_operand.hbm [shape: f32[2,4,2,128], index: 0, kind: input, shape index: {}]
  %s1 = inlined_call_operand.hbm [shape: f32[2,4,2,128], index: 1, kind: input, shape index: {}]
  %s2 = inlined_call_operand.vmem [shape: f32[2,13,128], index: 2, kind: output, shape index: {}]
  %s3 = sld [smem:[#allocation0]]
  $region57: #{tpu_custom_call.1} parent=0
    _
  %s5 = ssub.s32 1, %s3
  %s6 = scalar_select 0, %s5, %s3
  $region1: #{tpu_custom_call.1} parent=0
    #allocation6 [shape = 'u8[8192]{0}', space=vmem, size = 0x2000, scoped, tag = 'input window, operand 0']
    #allocation7 [shape = 's32[2]{0}', space=sflag, size = 0x8, scoped, tag = 'scoped memory for tpu_custom_call.1']
    #allocation8 [shape = 'u8[8192]{0}', space=vmem, size = 0x2000, scoped, tag = 'input window, operand 1']
    #allocation9 [shape = 's32[2]{0}', space=sflag, size = 0x8, scoped, tag = 'scoped memory for tpu_custom_call.1']
    %7 = vsyncpa [#allocation7], 0
    %s8 = scalar_lea.sflag [#allocation7], 1
    %9 = vsyncpa %s8, 0
    %10 = vsyncpa [#allocation9], 0
    %s11 = scalar_lea.sflag [#allocation9], 1
    %12 = vsyncpa %s11, 0
    loop: start=0, step=1, limit=4
    $region2: #{tpu_custom_call.1} parent=1 // loop_pre_header
      _
    $region3: #{tpu_custom_call.1} parent=1 // loop_header
      %s14 = sphi 0, %s18
      %p15 = scmp.ge.s32.totalorder %s14, 4
      %s21 = sphi 0, %s33
      %s22 = sphi 0, %s29
      %s23 = sphi 0, %s21
      %s24 = sphi 0, %s22
      %s25 = sphi 0, %s23
      %s26 = sphi 0, %s24
      %s38 = sphi 0, %s40
      %s41 = sphi 0, %s38
      %s42 = sphi 0, %s41
      %s58 = sphi 0, %s42
      %s66 = sphi 0, %s68
      %s69 = sphi 0, %s66
      %s70 = sphi 0, %s69
      %s86 = sphi 0, %s70
      %s92 = sphi 0, %s94
      %s95 = sphi 0, %s92
      %s96 = sphi 0, %s95
      %s112 = sphi 0, %s96
    $region4: #{tpu_custom_call.1} parent=1 // loop_header_branch
      %17 = sbr.rel (%p15) target = $region8
    $region5: #{tpu_custom_call.1} parent=1 // loop_body
      %s19 = ssub.s32 %s14, 1
      %s20 = ssub.s32 %s14, 2
      %s27 = sadd.s32 1, %s22
      %p28 = scmp.ge.s32.totalorder %s27, 1
      %s29 = scalar_select %p28, 0, %s27
      %s30 = sadd.s32 1, %s21
      %s31 = scalar_select %p28, %s30, %s21
      %p32 = scmp.ge.s32.totalorder %s31, 2
      %s33 = scalar_select %p32, 0, %s31
      %s34 = ssub.s32 %s21, %s33
      %s35 = ssub.s32 %s22, %s29
      %s36 = sor.u32 %s34, %s35
      %p37 = scmp.eq.s32.totalorder %s36, 0
      %s39 = sadd.s32 %s38, 1
      %s40 = scalar_select %p37, %s38, %s39
      %p43 = pneg %p37
      %p44 = scmp.eq.s32.totalorder %s14, 1
      %p45 = por %p43, %p44
      %p46 = scmp.ne.s32.totalorder %s38, %s41
      %p47 = scmp.eq.s32.totalorder %s14, 0
      %p48 = por %p46, %p47
      %p49 = scmp.ne.s32.totalorder %s38, %s41
      %p50 = scmp.eq.s32.totalorder %s19, 1
      %p51 = por %p49, %p50
      %p52 = scmp.ne.s32.totalorder %s41, %s42
      %p53 = scmp.eq.s32.totalorder %s19, 0
      %p54 = por %p52, %p53
      %p55 = scmp.ne.s32.totalorder %s41, %s42
      %p56 = scmp.eq.s32.totalorder %s20, 1
      %p57 = por %p55, %p56
      %p59 = scmp.ne.s32.totalorder %s42, %s58
      %p60 = scmp.eq.s32.totalorder %s20, 0
      %p61 = por %p59, %p60
      %s62 = ssub.s32 %s21, %s33
      %s63 = ssub.s32 %s22, %s29
      %s64 = sor.u32 %s62, %s63
      %p65 = scmp.eq.s32.totalorder %s64, 0
      %s67 = sadd.s32 %s66, 1
      %s68 = scalar_select %p65, %s66, %s67
      %p71 = pneg %p65
      %p72 = scmp.eq.s32.totalorder %s14, 1
      %p73 = por %p71, %p72
      %p74 = scmp.ne.s32.totalorder %s66, %s69
      %p75 = scmp.eq.s32.totalorder %s14, 0
      %p76 = por %p74, %p75
      %p77 = scmp.ne.s32.totalorder %s66, %s69
      %p78 = scmp.eq.s32.totalorder %s19, 1
      %p79 = por %p77, %p78
      %p80 = scmp.ne.s32.totalorder %s69, %s70
      %p81 = scmp.eq.s32.totalorder %s19, 0
      %p82 = por %p80, %p81
      %p83 = scmp.ne.s32.totalorder %s69, %s70
      %p84 = scmp.eq.s32.totalorder %s20, 1
      %p85 = por %p83, %p84
      %p87 = scmp.ne.s32.totalorder %s70, %s86
      %p88 = scmp.eq.s32.totalorder %s20, 0
      %p89 = por %p87, %p88
      %s90 = ssub.s32 %s21, %s33
      %p91 = scmp.eq.s32.totalorder %s90, 0
      %s93 = sadd.s32 %s92, 1
      %s94 = scalar_select %p91, %s92, %s93
      %p97 = pneg %p91
      %p98 = scmp.eq.s32.totalorder %s14, 1
      %p99 = por %p97, %p98
      %p100 = scmp.ne.s32.totalorder %s92, %s95
      %p101 = scmp.eq.s32.totalorder %s14, 0
      %p102 = por %p100, %p101
      %p103 = scmp.ne.s32.totalorder %s92, %s95
      %p104 = scmp.eq.s32.totalorder %s19, 1
      %p105 = por %p103, %p104
      %p106 = scmp.ne.s32.totalorder %s95, %s96
      %p107 = scmp.eq.s32.totalorder %s19, 0
      %p108 = por %p106, %p107
      %p109 = scmp.ne.s32.totalorder %s95, %s96
      %p110 = scmp.eq.s32.totalorder %s20, 1
      %p111 = por %p109, %p110
      %p113 = scmp.ne.s32.totalorder %s96, %s112
      %p114 = scmp.eq.s32.totalorder %s20, 0
      %p115 = por %p113, %p114
      %p116 = scmp.le.s32.totalorder 1, %s14
      %p117 = scmp.lt.s32.totalorder %s14, 3
      %p118 = pnand %p116, %p117
      %p119 = pneg %p118
      // Predicated region
      $region9: #{tpu_custom_call.1} parent=5 // pred_check
        _
      $region10: #{tpu_custom_call.1} parent=5 // pred_check_branch
        %121 = sbr.rel (%p118) target = $region12
      $region11: #{tpu_custom_call.1} parent=5 // pred_region
        %s122 = ssub.s32 %s14, 1
      $region12: #{tpu_custom_call.1} parent=5 // pred_fallthru
        _
      %p123 = scmp.lt.s32.totalorder %s14, 2
      // Predicated region
      $region13: #{tpu_custom_call.1} parent=5 // pred_check
        %p124 = pneg %p123
      $region14: #{tpu_custom_call.1} parent=5 // pred_check_branch
        %126 = sbr.rel (%p124) target = $region16
      $region15: #{tpu_custom_call.1} parent=5 // pred_region
        // Predicated region
        $region17: #{tpu_custom_call.1} parent=15 // pred_check
          %p127 = pneg %p48
        $region18: #{tpu_custom_call.1} parent=15 // pred_check_branch
          %129 = sbr.rel (%p127) target = $region20
        $region19: #{tpu_custom_call.1} parent=15 // pred_region
          %s130 = sand.u32 %s38, 1
          %s131 = scalar_lea.sflag [#allocation7], %s130
          %s132 = sand.u32 %s38, 1
          %s133 = smul.addr %s132, 8
          %s134 = scalar_lea.vmem [#allocation6], %s133
          %s136 = ssub.s32 128, 128
          %137 = vsyncadd %s131, %s136
          %s138 = smul.addr %s21, 4
          %s139 = sadd.s32 %s22, %s138
          %s140 = smul.addr %s139, 32
          %s141 = scalar_lea.hbm %s0, %s140
          %s142 = sshll.u32 %s134, 4
          %s143 = int_to_ptr.vmem [resolvable:$true] %s142
          %148 = dma.hbm_to_vmem [thread:$0]  %s141, 128, %s143, %s131, 32, 32, 2
        $region20: #{tpu_custom_call.1} parent=15 // pred_fallthru
          _
        // Predicated region
        $region21: #{tpu_custom_call.1} parent=15 // pred_check
          %p149 = pneg %p76
        $region22: #{tpu_custom_call.1} parent=15 // pred_check_branch
          %151 = sbr.rel (%p149) target = $region24
        $region23: #{tpu_custom_call.1} parent=15 // pred_region
          %s152 = sand.u32 %s66, 1
          %s153 = scalar_lea.sflag [#allocation9], %s152
          %s154 = sand.u32 %s66, 1
          %s155 = smul.addr %s154, 8
          %s156 = scalar_lea.vmem [#allocation8], %s155
          %s158 = ssub.s32 128, 128
          %159 = vsyncadd %s153, %s158
          %s160 = smul.addr %s21, 4
          %s161 = sadd.s32 %s22, %s160
          %s162 = smul.addr %s161, 32
          %s163 = scalar_lea.hbm %s1, %s162
          %s164 = sshll.u32 %s156, 4
          %s165 = int_to_ptr.vmem [resolvable:$true] %s164
          %170 = dma.hbm_to_vmem [thread:$0]  %s163, 128, %s165, %s153, 32, 32, 2
        $region24: #{tpu_custom_call.1} parent=15 // pred_fallthru
          _
      $region16: #{tpu_custom_call.1} parent=5 // pred_fallthru
        _
      %p171 = scmp.le.s32.totalorder 1, %s14
      %p172 = scmp.lt.s32.totalorder %s14, 3
      %p173 = pnand %p171, %p172
      %p174 = pneg %p173
      // Predicated region
      $region25: #{tpu_custom_call.1} parent=5 // pred_check
        _
      $region26: #{tpu_custom_call.1} parent=5 // pred_check_branch
        %176 = sbr.rel (%p173) target = $region28
      $region27: #{tpu_custom_call.1} parent=5 // pred_region
        %s177 = ssub.s32 %s14, 1
        %s178 = sand.u32 %s41, 1
        %s179 = scalar_lea.sflag [#allocation7], %s178
        %s180 = sand.u32 %s41, 1
        %s181 = smul.addr %s180, 8
        %s182 = scalar_lea.vmem [#allocation6], %s181
        // Predicated region
        $region29: #{tpu_custom_call.1} parent=27 // pred_check
          %p183 = pneg %p54
        $region30: #{tpu_custom_call.1} parent=27 // pred_check_branch
          %185 = sbr.rel (%p183) target = $region32
        $region31: #{tpu_custom_call.1} parent=27 // pred_region
          %186 = dma.done %s179, 128
        $region32: #{tpu_custom_call.1} parent=27 // pred_fallthru
          _
        %s187 = sand.u32 %s69, 1
        %s188 = scalar_lea.sflag [#allocation9], %s187
        %s189 = sand.u32 %s69, 1
        %s190 = smul.addr %s189, 8
        %s191 = scalar_lea.vmem [#allocation8], %s190
        // Predicated region
        $region33: #{tpu_custom_call.1} parent=27 // pred_check
          %p192 = pneg %p82
        $region34: #{tpu_custom_call.1} parent=27 // pred_check_branch
          %194 = sbr.rel (%p192) target = $region36
        $region35: #{tpu_custom_call.1} parent=27 // pred_region
          %195 = dma.done %s188, 128
        $region36: #{tpu_custom_call.1} parent=27 // pred_fallthru
          _
        %s196 = sand.u32 %s41, 1
        %s197 = scalar_lea.sflag [#allocation7], %s196
        %s198 = sand.u32 %s41, 1
        %s199 = smul.addr %s198, 8
        %s200 = scalar_lea.vmem [#allocation6], %s199
        %p201 = pneg %p54
        %p202 = pneg %p51
        %s203 = sand.u32 %s69, 1
        %s204 = scalar_lea.sflag [#allocation9], %s203
        %s205 = sand.u32 %s69, 1
        %s206 = smul.addr %s205, 8
        %s207 = scalar_lea.vmem [#allocation8], %s206
        %p208 = pneg %p82
        %p209 = pneg %p79
        %p210 = pneg %p108
        %p211 = pneg %p105
        %p212 = scmp.lt.s32.totalorder %s23, 1
        %s213 = scalar_select %p212, %s23, 1
        %s214 = smul.addr %s213, 2
        %s215 = smul.addr %s214, 8
        %s216 = scalar_lea.vmem %s2, %s215
        %p217 = scmp.lt.s32.totalorder %s23, 1
        %s218 = scalar_select %p217, %s23, 1
        %s219 = smul.addr %s218, 2
        %s220 = smul.addr %s219, 8
        %s221 = scalar_lea.vmem %s2, %s220
        %p222 = scmp.eq.s32.totalorder %s24, 0
        // Predicated region
        $region37: #{tpu_custom_call.1} parent=27 // pred_check
          %p223 = pneg %p222
        $region38: #{tpu_custom_call.1} parent=27 // pred_check_branch
          %225 = sbr.rel (%p223) target = $region40
        $region39: #{tpu_custom_call.1} parent=27 // pred_region
          %226 = vst [vmem:[#allocation2] sm:$0x3] 0.0
          %227 = vst [vmem:[#allocation2 + $0x2] sm:$0x3] 0.0
          %228 = vst [vmem:[#allocation2 + $0x4] sm:$0x3] 0.0
          %229 = vst [vmem:[#allocation2 + $0x6] sm:$0x3] 0.0
          %230 = vst [vmem:[#allocation3] sm:$0x3] 0.0
          %231 = vst [vmem:[#allocation3 + $0x2] sm:$0x3] 0.0
          %232 = vst [vmem:[#allocation3 + $0x4] sm:$0x3] 0.0
          %233 = vst [vmem:[#allocation3 + $0x6] sm:$0x3] 0.0
          %234 = vst [vmem:[#allocation4] sm:$0x3] 0.0
          %235 = vst [vmem:[#allocation4 + $0x2] sm:$0x3] 0.0
          %236 = vst [vmem:[#allocation4 + $0x4] sm:$0x3] 0.0
          %237 = vst [vmem:[#allocation4 + $0x6] sm:$0x3] 0.0
          %238 = vst [vmem:[#allocation5] sm:$0x3] 0.0
        $region40: #{tpu_custom_call.1} parent=27 // pred_fallthru
          _
        %v239 = vld [vmem:[%s182] sm:$0x3]
        %s240 = scalar_lea.vmem %s182, 2 [#allocation6]
        %v241 = vld [vmem:[%s240] sm:$0x3]
        %s242 = scalar_lea.vmem %s182, 4 [#allocation6]
        %v243 = vld [vmem:[%s242] sm:$0x3]
        %s244 = scalar_lea.vmem %s182, 6 [#allocation6]
        %v245 = vld [vmem:[%s244] sm:$0x3]
        %v246 = vld [vmem:[%s191] sm:$0x3]
        %s247 = scalar_lea.vmem %s191, 2 [#allocation8]
        %v248 = vld [vmem:[%s247] sm:$0x3]
        %s249 = scalar_lea.vmem %s191, 4 [#allocation8]
        %v250 = vld [vmem:[%s249] sm:$0x3]
        %s251 = scalar_lea.vmem %s191, 6 [#allocation8]
        %v252 = vld [vmem:[%s251] sm:$0x3]
        %v253 = vmax.f32 %v239, %v241
        %v254 = vmax.f32 %v253, %v243
        %v255 = vmax.f32 %v254, %v245
        %v256 = vsub.f32 %v239, %v255
        %v257 = vmul.f32 %v256, 1.442695
        %v258 = vpow.pop %v257
        %v259 = vmul.f32 %v246, %v256
        %v260 = vmul.f32 %v239, 0.5
        %v261 = vtanh.pop %v260
        %v262 = vmul.f32 %v261, 0.5
        %v263 = vadd.f32 %v262, 0.5
        %v264 = vmul.f32 %v263, %v246
        %v265 = vmul.f32 %v263, %v263
        %v266 = vmul.f32 %v246, %v246
        %v267 = vsub.f32 %v241, %v255
        %v268 = vmul.f32 %v267, 1.442695
        %v269 = vpow.pop %v268
        %v270 = vadd.f32 %v258, %v269
        %v271 = vadd.f32 %v246, %v248
        %v272 = vmul.f32 %v248, %v267
        %v273 = vadd.f32 %v259, %v272
        %v274 = vmul.f32 %v241, 0.5
        %v275 = vtanh.pop %v274
        %v276 = vmul.f32 %v275, 0.5
        %v277 = vadd.f32 %v276, 0.5
        %v278 = vmul.f32 %v277, %v248
        %v279 = vmul.f32 %v277, %v277
        %v280 = vmul.f32 %v248, %v248
        %v281 = vsub.f32 %v243, %v255
        %v282 = vmul.f32 %v281, 1.442695
        %v283 = vpow.pop %v282
        %v284 = vadd.f32 %v270, %v283
        %v285 = vadd.f32 %v271, %v250
        %v286 = vmul.f32 %v250, %v281
        %v287 = vadd.f32 %v273, %v286
        %v288 = vmul.f32 %v243, 0.5
        %v289 = vtanh.pop %v288
        %v290 = vmul.f32 %v289, 0.5
        %v291 = vadd.f32 %v290, 0.5
        %v292 = vmul.f32 %v291, %v250
        %v293 = vmul.f32 %v291, %v291
        %v294 = vmul.f32 %v250, %v250
        %v295 = vsub.f32 %v245, %v255
        %v296 = vmul.f32 %v295, 1.442695
        %v297 = vpow.pop %v296
        %v298 = vadd.f32 %v284, %v297
        %v299 = vadd.f32 %v285, %v252
        %v300 = vmul.f32 %v252, %v295
        %v301 = vadd.f32 %v287, %v300
        %v302 = vmul.f32 %v245, 0.5
        %v303 = vtanh.pop %v302
        %v304 = vmul.f32 %v303, 0.5
        %v305 = vadd.f32 %v304, 0.5
        %v306 = vmul.f32 %v305, %v252
        %v307 = vmul.f32 %v305, %v305
        %v308 = vmul.f32 %v252, %v252
        %v309 = vlog2.pop %v298
        %v310 = vmul.f32 %v309, 0.6931472
        %v311 = vmul.f32 %v299, %v310
        %v312 = vsub.f32 %v311, %v301
        %v313 = vld [vmem:[#allocation2] sm:$0x3]
        %v314 = vadd.f32 %v313, %v264
        %315 = vst [vmem:[#allocation2] sm:$0x3] %v314
        %v316 = vld [vmem:[#allocation3] sm:$0x3]
        %v317 = vadd.f32 %v316, %v265
        %318 = vst [vmem:[#allocation3] sm:$0x3] %v317
        %v319 = vld [vmem:[#allocation4] sm:$0x3]
        %v320 = vadd.f32 %v319, %v266
        %321 = vst [vmem:[#allocation4] sm:$0x3] %v320
        %s322 = scalar_lea.vmem [#allocation2], 2
        %v323 = vld [vmem:[%s322] sm:$0x3]
        %v324 = vadd.f32 %v323, %v278
        %325 = vst [vmem:[%s322] sm:$0x3] %v324
        %s326 = scalar_lea.vmem [#allocation3], 2
        %v327 = vld [vmem:[%s326] sm:$0x3]
        %v328 = vadd.f32 %v327, %v279
        %329 = vst [vmem:[%s326] sm:$0x3] %v328
        %s330 = scalar_lea.vmem [#allocation4], 2
        %v331 = vld [vmem:[%s330] sm:$0x3]
        %v332 = vadd.f32 %v331, %v280
        %333 = vst [vmem:[%s330] sm:$0x3] %v332
        %s334 = scalar_lea.vmem [#allocation2], 4
        %v335 = vld [vmem:[%s334] sm:$0x3]
        %v336 = vadd.f32 %v335, %v292
        %337 = vst [vmem:[%s334] sm:$0x3] %v336
        %s338 = scalar_lea.vmem [#allocation3], 4
        %v339 = vld [vmem:[%s338] sm:$0x3]
        %v340 = vadd.f32 %v339, %v293
        %341 = vst [vmem:[%s338] sm:$0x3] %v340
        %s342 = scalar_lea.vmem [#allocation4], 4
        %v343 = vld [vmem:[%s342] sm:$0x3]
        %v344 = vadd.f32 %v343, %v294
        %345 = vst [vmem:[%s342] sm:$0x3] %v344
        %s346 = scalar_lea.vmem [#allocation2], 6
        %v347 = vld [vmem:[%s346] sm:$0x3]
        %v348 = vadd.f32 %v347, %v306
        %349 = vst [vmem:[%s346] sm:$0x3] %v348
        %s350 = scalar_lea.vmem [#allocation3], 6
        %v351 = vld [vmem:[%s350] sm:$0x3]
        %v352 = vadd.f32 %v351, %v307
        %353 = vst [vmem:[%s350] sm:$0x3] %v352
        %s354 = scalar_lea.vmem [#allocation4], 6
        %v355 = vld [vmem:[%s354] sm:$0x3]
        %v356 = vadd.f32 %v355, %v308
        %357 = vst [vmem:[%s354] sm:$0x3] %v356
        %v358 = vld [vmem:[#allocation5] sm:$0x3]
        %v359 = vadd.f32 %v358, %v312
        %360 = vst [vmem:[#allocation5] sm:$0x3] %v359
        // Predicated region
        $region41: #{tpu_custom_call.1} parent=27 // pred_check
          %p361 = pneg %p222
        $region42: #{tpu_custom_call.1} parent=27 // pred_check_branch
          %363 = sbr.rel (%p361) target = $region44
        $region43: #{tpu_custom_call.1} parent=27 // pred_region
          %v364 = vld [vmem:[#allocation2] sm:$0x3]
          %v365 = vld [vmem:[#allocation2 + $0x2] sm:$0x3]
          %v366 = vld [vmem:[#allocation2 + $0x4] sm:$0x3]
          %v367 = vld [vmem:[#allocation2 + $0x6] sm:$0x3]
          %vm368 = vcmask 1041408
          %v369 = vsel %vm368, %v364, 0.0
          %v370 = vrot.slane %v369, 4
          %v371 = vadd.f32 %v369, %v370
          %v372 = vrot.slane %v371, 2
          %v373 = vadd.f32 %v371, %v372
          %v374 = vrot.slane %v373, 1
          %v375 = vadd.f32 %v373, %v374
          %v376 = vsel %vm368, %v365, 0.0
          %v377 = vrot.slane %v376, 4
          %v378 = vadd.f32 %v376, %v377
          %v379 = vrot.slane %v378, 2
          %v380 = vadd.f32 %v378, %v379
          %v381 = vrot.slane %v380, 1
          %v382 = vadd.f32 %v380, %v381
          %v383 = vsel %vm368, %v366, 0.0
          %v384 = vrot.slane %v383, 4
          %v385 = vadd.f32 %v383, %v384
          %v386 = vrot.slane %v385, 2
          %v387 = vadd.f32 %v385, %v386
          %v388 = vrot.slane %v387, 1
          %v389 = vadd.f32 %v387, %v388
          %v390 = vsel %vm368, %v367, 0.0
          %v391 = vrot.slane %v390, 4
          %v392 = vadd.f32 %v390, %v391
          %v393 = vrot.slane %v392, 2
          %v394 = vadd.f32 %v392, %v393
          %v395 = vrot.slane %v394, 1
          %v396 = vadd.f32 %v394, %v395
          %vm401 = vcmask 1041409
          %v402 = vsel %vm401, %v382, %v375
          %vm403 = vcmask 1042434
          %v404 = vsel %vm403, %v389, %v402
          %vm405 = vcmask 1043459
          %v406 = vsel %vm405, %v396, %v404
          %408 = vst [vmem:[%s221] sm:$0xf] %v406
          %v409 = vld [vmem:[#allocation3] sm:$0x3]
          %v410 = vld [vmem:[#allocation3 + $0x2] sm:$0x3]
          %v411 = vld [vmem:[#allocation3 + $0x4] sm:$0x3]
          %v412 = vld [vmem:[#allocation3 + $0x6] sm:$0x3]
          %v413 = vsel %vm368, %v409, 0.0
          %v414 = vrot.slane %v413, 4
          %v415 = vadd.f32 %v413, %v414
          %v416 = vrot.slane %v415, 2
          %v417 = vadd.f32 %v415, %v416
          %v418 = vrot.slane %v417, 1
          %v419 = vadd.f32 %v417, %v418
          %v420 = vsel %vm368, %v410, 0.0
          %v421 = vrot.slane %v420, 4
          %v422 = vadd.f32 %v420, %v421
          %v423 = vrot.slane %v422, 2
          %v424 = vadd.f32 %v422, %v423
          %v425 = vrot.slane %v424, 1
          %v426 = vadd.f32 %v424, %v425
          %v427 = vsel %vm368, %v411, 0.0
          %v428 = vrot.slane %v427, 4
          %v429 = vadd.f32 %v427, %v428
          %v430 = vrot.slane %v429, 2
          %v431 = vadd.f32 %v429, %v430
          %v432 = vrot.slane %v431, 1
          %v433 = vadd.f32 %v431, %v432
          %v434 = vsel %vm368, %v412, 0.0
          %v435 = vrot.slane %v434, 4
          %v436 = vadd.f32 %v434, %v435
          %v437 = vrot.slane %v436, 2
          %v438 = vadd.f32 %v436, %v437
          %v439 = vrot.slane %v438, 1
          %v440 = vadd.f32 %v438, %v439
          %v445 = vsel %vm401, %v426, %v419
          %v446 = vsel %vm403, %v433, %v445
          %v447 = vsel %vm405, %v440, %v446
          %449 = vst [vmem:[%s221 + $0x4] sm:$0xf] %v447
          %v450 = vld [vmem:[#allocation4] sm:$0x3]
          %v451 = vld [vmem:[#allocation4 + $0x2] sm:$0x3]
          %v452 = vld [vmem:[#allocation4 + $0x4] sm:$0x3]
          %v453 = vld [vmem:[#allocation4 + $0x6] sm:$0x3]
          %v454 = vsel %vm368, %v450, 0.0
          %v455 = vrot.slane %v454, 4
          %v456 = vadd.f32 %v454, %v455
          %v457 = vrot.slane %v456, 2
          %v458 = vadd.f32 %v456, %v457
          %v459 = vrot.slane %v458, 1
          %v460 = vadd.f32 %v458, %v459
          %v461 = vsel %vm368, %v451, 0.0
          %v462 = vrot.slane %v461, 4
          %v463 = vadd.f32 %v461, %v462
          %v464 = vrot.slane %v463, 2
          %v465 = vadd.f32 %v463, %v464
          %v466 = vrot.slane %v465, 1
          %v467 = vadd.f32 %v465, %v466
          %v468 = vsel %vm368, %v452, 0.0
          %v469 = vrot.slane %v468, 4
          %v470 = vadd.f32 %v468, %v469
          %v471 = vrot.slane %v470, 2
          %v472 = vadd.f32 %v470, %v471
          %v473 = vrot.slane %v472, 1
          %v474 = vadd.f32 %v472, %v473
          %v475 = vsel %vm368, %v453, 0.0
          %v476 = vrot.slane %v475, 4
          %v477 = vadd.f32 %v475, %v476
          %v478 = vrot.slane %v477, 2
          %v479 = vadd.f32 %v477, %v478
          %v480 = vrot.slane %v479, 1
          %v481 = vadd.f32 %v479, %v480
          %v486 = vsel %vm401, %v467, %v460
          %v487 = vsel %vm403, %v474, %v486
          %v488 = vsel %vm405, %v481, %v487
          %490 = vst [vmem:[%s221 + $0x8] sm:$0xf] %v488
          %v491 = vld [vmem:[#allocation5] sm:$0x3]
          %v492 = vsel %vm368, %v491, 0.0
          %v493 = vrot.slane %v492, 4
          %v494 = vadd.f32 %v492, %v493
          %v495 = vrot.slane %v494, 2
          %v496 = vadd.f32 %v494, %v495
          %v497 = vrot.slane %v496, 1
          %v498 = vadd.f32 %v496, %v497
          %499 = vst [vmem:[%s221 + $0xc] sm:$0x1] %v498
        $region44: #{tpu_custom_call.1} parent=27 // pred_fallthru
          _
        %p500 = scmp.lt.s32.totalorder %s23, 1
        %s501 = scalar_select %p500, %s23, 1
        %s502 = smul.addr %s501, 2
        %s503 = smul.addr %s502, 8
        %s504 = scalar_lea.vmem %s2, %s503
        // Predicated region
        $region45: #{tpu_custom_call.1} parent=27 // pred_check
          %p505 = pneg %p105
        $region46: #{tpu_custom_call.1} parent=27 // pred_check_branch
          %507 = sbr.rel (%p505) target = $region48
        $region47: #{tpu_custom_call.1} parent=27 // pred_region
          _
        $region48: #{tpu_custom_call.1} parent=27 // pred_fallthru
          _
      $region28: #{tpu_custom_call.1} parent=5 // pred_fallthru
        _
      %p508 = scmp.le.s32.totalorder 2, %s14
      // Predicated region
      $region49: #{tpu_custom_call.1} parent=5 // pred_check
        %p509 = pneg %p508
      $region50: #{tpu_custom_call.1} parent=5 // pred_check_branch
        %511 = sbr.rel (%p509) target = $region52
      $region51: #{tpu_custom_call.1} parent=5 // pred_region
        %s512 = ssub.s32 %s14, 2
        // Predicated region
        $region53: #{tpu_custom_call.1} parent=51 // pred_check
          %p513 = pneg %p111
        $region54: #{tpu_custom_call.1} parent=51 // pred_check_branch
          %515 = sbr.rel (%p513) target = $region56
        $region55: #{tpu_custom_call.1} parent=51 // pred_region
          %p516 = scmp.lt.s32.totalorder %s25, 1
          %s517 = scalar_select %p516, %s25, 1
          %s518 = smul.addr %s517, 2
          %s519 = smul.addr %s518, 8
          %s520 = scalar_lea.vmem %s2, %s519
        $region56: #{tpu_custom_call.1} parent=51 // pred_fallthru
          _
      $region52: #{tpu_custom_call.1} parent=5 // pred_fallthru
        _
    $region6: #{tpu_custom_call.1} parent=1 // loop_footer
      %s18 = sadd.s32 1, %s14
    $region7: #{tpu_custom_call.1} parent=1 // loop_footer_branch
      %13 = sbr.rel target = $region3
    $region8: #{tpu_custom_call.1} parent=1 // loop_exit
      _
    %521 = vsyncpa [#allocation7], 1
    %s522 = scalar_lea.sflag [#allocation7], 1
    %523 = vsyncpa %s522, 1
    %524 = vsyncpa [#allocation9], 1
    %s525 = scalar_lea.sflag [#allocation9], 1
    %526 = vsyncpa %s525, 1

</llo_original>
